<compile_context>
chip_gen: v7x
topology: tpu7x:2x2x1
jax: 0.10.0
libtpu: 0.0.40
codegen_flags: <defaults>
</compile_context>

<pallas_src>
import functools

import jax
import jax.numpy as jnp
from jax.experimental import pallas as pl
from jax.experimental.pallas import tpu as pltpu


def autopad(k, p=None):
    if p is None:
        p = k // 2 if isinstance(k, int) else [x // 2 for x in k]
    return p


def _pick_row_tile(Ho, Wo, max_pixels):
    """Largest divisor TH of Ho with TH*Wo <= max_pixels, preferring >=2 tiles."""
    divs = [d for d in range(1, Ho + 1) if Ho % d == 0]
    fitting = [d for d in divs if d * Wo <= max_pixels]
    if not fitting:
        return 1
    multi = [d for d in fitting if Ho // d >= 2]
    return max(multi) if multi else max(fitting)


def _pick_tc2(C2p):
    """128-wide channel tiles on v5e, 256-wide on v6e/v7x when C2p allows."""
    tc2 = 128
    if C2p >= 256 and C2p % 256 == 0:
        try:
            kind = jax.devices()[0].device_kind.lower()
        except Exception:
            kind = ""
        if ("v5 lite" not in kind) and ("v5e" not in kind):
            tc2 = 256
    return tc2


def _conv_bn_silu_kernel(x_ref, w_ref, b_ref, o_ref, *, k, s, TH, Wo, KC1, TC2):
    # x_ref: (1, Hp, Wo, KC1)  kw-packed, zero-padded image rows (bf16),
    #                          resident per batch element.
    # w_ref: (k, KC1, TC2)     BN-scale-folded weights (bf16), resident per
    #                          (n, channel-tile) thanks to the grid order.
    # b_ref: (1, TC2)          fused BN bias (f32)
    # o_ref: (1, TH, Wo, TC2)  output row/channel tile (bf16)
    r = pl.program_id(2)
    row0 = pl.multiple_of(r * (TH * s), TH * s)   # first input row of this tile

    acc = jnp.zeros((TH * Wo, TC2), jnp.float32)
    # k taps (kh only; kw is folded into the contraction depth KC1 = k*C1).
    for kh in range(k):
        if s == 1:
            tap = x_ref[0, pl.ds(row0 + kh, TH), :, :]           # (TH, Wo, KC1)
        else:
            # TODO(synk): stride-2 path untested; value-level major-dim stride.
            span = (TH - 1) * s + 1
            tap = x_ref[0, pl.ds(row0 + kh, span), :, :][::s]    # (TH, Wo, KC1)
        acc = acc + jnp.dot(tap.reshape(TH * Wo, KC1), w_ref[kh],
                            preferred_element_type=jnp.float32)

    # BN scale already folded into w; add bias, SiLU, f32 epilogue, bf16 store.
    y = acc + b_ref[...]
    y = y * jax.nn.sigmoid(y)
    o_ref[0] = y.reshape(TH, Wo, TC2).astype(o_ref.dtype)


def conv_bn_silu(x_nchw, weight_oihw, gamma, beta, running_mean, running_var,
                 *, k=3, s=1, p=None, eps=1e-5):
    """Forward pass of yolov7 Conv (conv -> BN(eval) -> SiLU).

    x_nchw:      (N, C1, H, W)   float32
    weight_oihw: (C2, C1, k, k)  float32 (PyTorch conv weight layout)
    returns:     (N, C2, Ho, Wo) float32 (NCHW, like the PyTorch module)
    """
    p = autopad(k, p)
    N, C1, H, W = x_nchw.shape
    C2 = weight_oihw.shape[0]
    Hp, Wp = H + 2 * p, W + 2 * p
    Ho = (Hp - k) // s + 1
    Wo = (Wp - k) // s + 1
    KC1 = k * C1

    # ---- parameter prep (in a real model this is cached per layer) ----
    scale = gamma / jnp.sqrt(running_var + eps)                 # (C2,)
    bias = beta - running_mean * scale                          # (C2,)
    w_hwio = jnp.transpose(weight_oihw, (2, 3, 1, 0)) * scale   # BN scale folded in
    C2p = ((C2 + 127) // 128) * 128                             # lane-dense channels
    w_pad = (jnp.zeros((k, k, C1, C2p), jnp.float32)
             .at[..., :C2].set(w_hwio))
    # Fold kw into the contraction dim: (kh, kw*C1, C2p), bf16 MXU operand.
    w_pk = w_pad.reshape(k, KC1, C2p).astype(jnp.bfloat16)
    b_pad = jnp.zeros((1, C2p), jnp.float32).at[:, :C2].set(bias)

    # ---- activation prep: NCHW -> padded, kw-packed NHWC bf16 ----
    # TODO(synk): in a full network keep activations NHWC(+packed) bf16
    # end-to-end so these transposes/pads happen once at model ingest.
    x_nhwc = jnp.transpose(x_nchw, (0, 2, 3, 1)).astype(jnp.bfloat16)
    x_pad = jnp.pad(x_nhwc, ((0, 0), (p, p), (p, p), (0, 0)))
    # x_kw[n, h, wo, kw*C1 + c] = x_pad[n, h, wo*s + kw, c]  (W stride in XLA).
    cols = [x_pad[:, :, kw:kw + (Wo - 1) * s + 1:s, :] for kw in range(k)]
    x_kw = jnp.concatenate(cols, axis=-1)                       # (N, Hp, Wo, KC1)

    TC2 = _pick_tc2(C2p)
    # Bound the f32 accumulator to ~128 KB (<= half the vreg file).
    max_pixels = max(64, (128 * 1024) // (4 * TC2))
    TH = _pick_row_tile(Ho, Wo, max_pixels)
    # TODO(synk): with a VMEM-scratch accumulator TH*Wo could grow to >=512
    # to amortize per-grid-step overhead on small feature maps.

    kernel = functools.partial(_conv_bn_silu_kernel,
                               k=k, s=s, TH=TH, Wo=Wo, KC1=KC1, TC2=TC2)

    # Explicit scoped-VMEM budget from actual block footprints (+ headroom).
    img_b = Hp * Wo * KC1 * 2
    w_b = k * KC1 * TC2 * 2
    out_b = TH * Wo * TC2 * 2
    acc_b = TH * Wo * TC2 * 4
    footprint = 2 * (img_b + w_b + TC2 * 4 + out_b) + acc_b
    vmem_limit = int(min(96 << 20, max(32 << 20, 2 * footprint + (8 << 20))))

    cost = pl.CostEstimate(
        flops=2 * N * Ho * Wo * C2p * k * k * C1,
        transcendentals=N * Ho * Wo * C2p,
        bytes_accessed=(N * Hp * Wo * KC1 * 2 + k * KC1 * C2p * 2 + C2p * 4
                        + N * Ho * Wo * C2p * 2),
    )

    out_nhwc = pl.pallas_call(
        kernel,
        out_shape=jax.ShapeDtypeStruct((N, Ho, Wo, C2p), jnp.bfloat16),
        # Row-tile axis innermost: weight block index (depends only on c) is
        # constant across it -> weights DMA'd once per (n, channel tile).
        grid=(N, C2p // TC2, Ho // TH),
        in_specs=[
            # Full packed image resident per batch element (constant index
            # over c and r -> one DMA per n).  See halo-window TODO above.
            pl.BlockSpec((1, Hp, Wo, KC1), lambda n, c, r: (n, 0, 0, 0)),
            pl.BlockSpec((k, KC1, TC2), lambda n, c, r: (0, 0, c)),
            pl.BlockSpec((1, TC2), lambda n, c, r: (0, c)),
        ],
        out_specs=pl.BlockSpec((1, TH, Wo, TC2), lambda n, c, r: (n, r, 0, c)),
        compiler_params=pltpu.CompilerParams(
            dimension_semantics=("parallel", "parallel", "parallel"),
            vmem_limit_bytes=vmem_limit),
        cost_estimate=cost,
    )(x_kw, w_pk, b_pad)

    out_nhwc = out_nhwc[..., :C2]                     # drop channel padding
    return jnp.transpose(out_nhwc, (0, 3, 1, 2)).astype(jnp.float32)  # NCHW f32


def _reference_f32(x, w_oihw, gamma, beta, mean, var, *, k, s, p=None, eps=1e-5):
    p = autopad(k, p)
    y = jax.lax.conv_general_dilated(
        x, w_oihw, window_strides=(s, s), padding=((p, p), (p, p)),
        dimension_numbers=("NCHW", "OIHW", "NCHW"))
    sc = (gamma / jnp.sqrt(var + eps)).reshape(1, -1, 1, 1)
    b = (beta - mean * gamma / jnp.sqrt(var + eps)).reshape(1, -1, 1, 1)
    y = y * sc + b
    return y * jax.nn.sigmoid(y)


def _reference_bf16_ops(x, w_oihw, gamma, beta, mean, var, *, k, s, p=None, eps=1e-5):
    """Same precision contract as the kernel: bf16 operands (BN folded into w),
    f32 accumulation/epilogue, bf16 output writeback."""
    p = autopad(k, p)
    sc = gamma / jnp.sqrt(var + eps)
    b = (beta - mean * sc).reshape(1, -1, 1, 1)
    wq = (w_oihw * sc.reshape(-1, 1, 1, 1)).astype(jnp.bfloat16).astype(jnp.float32)
    xq = x.astype(jnp.bfloat16).astype(jnp.float32)
    y = jax.lax.conv_general_dilated(
        xq, wq, window_strides=(s, s), padding=((p, p), (p, p)),
        dimension_numbers=("NCHW", "OIHW", "NCHW"),
        precision=jax.lax.Precision.HIGHEST)
    y = y + b
    y = y * jax.nn.sigmoid(y)
    return y.astype(jnp.bfloat16).astype(jnp.float32)


if __name__ == "__main__":
    # Module config: Conv(c1=4, c2=8, k=3, s=1) -> autopad p=1, SiLU activation.
    N, C1, C2, H, W, K, S = 2, 4, 8, 16, 16, 3, 1

    key = jax.random.PRNGKey(0)
    kx, kw, kg, kb, km, kv = jax.random.split(key, 6)

    x = jax.random.normal(kx, (N, C1, H, W), dtype=jnp.float32)
    weight = jax.random.normal(kw, (C2, C1, K, K), dtype=jnp.float32) * 0.1
    gamma = 1.0 + 0.1 * jax.random.normal(kg, (C2,), dtype=jnp.float32)
    beta = 0.1 * jax.random.normal(kb, (C2,), dtype=jnp.float32)
    running_mean = 0.1 * jax.random.normal(km, (C2,), dtype=jnp.float32)
    running_var = 1.0 + 0.1 * jax.random.uniform(kv, (C2,), dtype=jnp.float32)

    out = conv_bn_silu(x, weight, gamma, beta, running_mean, running_var,
                       k=K, s=S)
    out = jax.block_until_ready(out)
    assert out.shape == (N, C2, H, W)

    ref_q = _reference_bf16_ops(x, weight, gamma, beta, running_mean,
                                running_var, k=K, s=S)
    ref_f = _reference_f32(x, weight, gamma, beta, running_mean, running_var,
                           k=K, s=S)
    # Tight check vs. a reference using the kernel's operand/output precision,
    # loose sanity check vs. the pure-f32 module semantics.
    assert jnp.max(jnp.abs(out - ref_q)) < 3e-2, "mismatch vs bf16-contract reference"
    assert jnp.max(jnp.abs(out - ref_f)) < 8e-2, "mismatch vs f32 reference"

    print("KERNEL_OK")
</pallas_src>

<mosaic_0001>
module attributes {stable_mosaic.version = 11 : i64} {
  func.func @_conv_bn_silu_kernel(%arg0: i32, %arg1: i32, %arg2: i32, %arg3: memref<1x18x16x12xbf16, #tpu.memory_space<vmem>>, %arg4: memref<3x12x128xbf16, #tpu.memory_space<vmem>>, %arg5: memref<1x128xf32, #tpu.memory_space<vmem>>, %arg6: memref<1x8x16x128xbf16, #tpu.memory_space<vmem>>) attributes {dimension_semantics = [#tpu.dimension_semantics<parallel>, #tpu.dimension_semantics<parallel>, #tpu.dimension_semantics<parallel>], iteration_bounds = array<i64: 2, 1, 2>, scalar_prefetch = 0 : i64, scratch_operands = 0 : i64, tpu.core_type = #tpu.core_type<tc>, window_params = [{transform_indices = @transform_0, window_bounds = array<i64: 1, 18, 16, 12>}, {transform_indices = @transform_1, window_bounds = array<i64: 3, 12, 128>}, {transform_indices = @transform_2, window_bounds = array<i64: 1, 128>}, {transform_indices = @transform_3, window_bounds = array<i64: 1, 8, 16, 128>}]} {
    %c8_i32 = arith.constant 8 : i32
    %0 = arith.muli %arg2, %c8_i32 : i32
    %1 = tpu.assume_multiple %0, 8 : i32
    %cst = arith.constant 0.000000e+00 : f32
    %2 = vector.broadcast %cst : f32 to vector<128x128xf32>
    %c0_i32 = arith.constant 0 : i32
    %3 = arith.addi %1, %c0_i32 : i32
    %c0 = arith.constant 0 : index
    %4 = arith.index_cast %3 : i32 to index
    %c0_0 = arith.constant 0 : index
    %c0_1 = arith.constant 0 : index
    %5 = vector.load %arg3[%c0, %4, %c0_0, %c0_1] : memref<1x18x16x12xbf16, #tpu.memory_space<vmem>>, vector<1x8x16x12xbf16>
    %6 = vector.shape_cast %5 : vector<1x8x16x12xbf16> to vector<8x16x12xbf16>
    %7 = vector.shape_cast %6 : vector<8x16x12xbf16> to vector<128x12xbf16>
    %c0_2 = arith.constant 0 : index
    %c0_3 = arith.constant 0 : index
    %c0_4 = arith.constant 0 : index
    %8 = vector.load %arg4[%c0_2, %c0_3, %c0_4] : memref<3x12x128xbf16, #tpu.memory_space<vmem>>, vector<1x12x128xbf16>
    %9 = vector.shape_cast %8 : vector<1x12x128xbf16> to vector<12x128xbf16>
    %cst_5 = arith.constant dense<0.000000e+00> : vector<128x128xf32>
    %10 = tpu.matmul %7, %9, %cst_5 {dimension_numbers = #tpu.dot_dimension_numbers<[1], [0], [0], [1], [0, 0, 1, 1], [], []>} : vector<128x12xbf16>, vector<12x128xbf16>, vector<128x128xf32> -> vector<128x128xf32>
    %11 = arith.addf %2, %10 : vector<128x128xf32>
    %c1_i32 = arith.constant 1 : i32
    %12 = arith.addi %1, %c1_i32 : i32
    %c0_6 = arith.constant 0 : index
    %13 = arith.index_cast %12 : i32 to index
    %c0_7 = arith.constant 0 : index
    %c0_8 = arith.constant 0 : index
    %14 = vector.load %arg3[%c0_6, %13, %c0_7, %c0_8] : memref<1x18x16x12xbf16, #tpu.memory_space<vmem>>, vector<1x8x16x12xbf16>
    %15 = vector.shape_cast %14 : vector<1x8x16x12xbf16> to vector<8x16x12xbf16>
    %16 = vector.shape_cast %15 : vector<8x16x12xbf16> to vector<128x12xbf16>
    %c1 = arith.constant 1 : index
    %c0_9 = arith.constant 0 : index
    %c0_10 = arith.constant 0 : index
    %17 = vector.load %arg4[%c1, %c0_9, %c0_10] : memref<3x12x128xbf16, #tpu.memory_space<vmem>>, vector<1x12x128xbf16>
    %18 = vector.shape_cast %17 : vector<1x12x128xbf16> to vector<12x128xbf16>
    %cst_11 = arith.constant dense<0.000000e+00> : vector<128x128xf32>
    %19 = tpu.matmul %16, %18, %cst_11 {dimension_numbers = #tpu.dot_dimension_numbers<[1], [0], [0], [1], [0, 0, 1, 1], [], []>} : vector<128x12xbf16>, vector<12x128xbf16>, vector<128x128xf32> -> vector<128x128xf32>
    %20 = arith.addf %11, %19 : vector<128x128xf32>
    %c2_i32 = arith.constant 2 : i32
    %21 = arith.addi %1, %c2_i32 : i32
    %c0_12 = arith.constant 0 : index
    %22 = arith.index_cast %21 : i32 to index
    %c0_13 = arith.constant 0 : index
    %c0_14 = arith.constant 0 : index
    %23 = vector.load %arg3[%c0_12, %22, %c0_13, %c0_14] : memref<1x18x16x12xbf16, #tpu.memory_space<vmem>>, vector<1x8x16x12xbf16>
    %24 = vector.shape_cast %23 : vector<1x8x16x12xbf16> to vector<8x16x12xbf16>
    %25 = vector.shape_cast %24 : vector<8x16x12xbf16> to vector<128x12xbf16>
    %c2 = arith.constant 2 : index
    %c0_15 = arith.constant 0 : index
    %c0_16 = arith.constant 0 : index
    %26 = vector.load %arg4[%c2, %c0_15, %c0_16] : memref<3x12x128xbf16, #tpu.memory_space<vmem>>, vector<1x12x128xbf16>
    %27 = vector.shape_cast %26 : vector<1x12x128xbf16> to vector<12x128xbf16>
    %cst_17 = arith.constant dense<0.000000e+00> : vector<128x128xf32>
    %28 = tpu.matmul %25, %27, %cst_17 {dimension_numbers = #tpu.dot_dimension_numbers<[1], [0], [0], [1], [0, 0, 1, 1], [], []>} : vector<128x12xbf16>, vector<12x128xbf16>, vector<128x128xf32> -> vector<128x128xf32>
    %29 = arith.addf %20, %28 : vector<128x128xf32>
    %c0_18 = arith.constant 0 : index
    %c0_19 = arith.constant 0 : index
    %30 = vector.load %arg5[%c0_18, %c0_19] : memref<1x128xf32, #tpu.memory_space<vmem>>, vector<1x128xf32>
    %31 = vector.broadcast %30 : vector<1x128xf32> to vector<128x128xf32>
    %32 = arith.addf %29, %31 : vector<128x128xf32>
    %33 = arith.negf %32 : vector<128x128xf32>
    %34 = math.exp %33 : vector<128x128xf32>
    %cst_20 = arith.constant 1.000000e+00 : f32
    %35 = vector.broadcast %cst_20 : f32 to vector<128x128xf32>
    %36 = arith.addf %35, %34 : vector<128x128xf32>
    %37 = arith.divf %35, %36 : vector<128x128xf32>
    %38 = arith.mulf %32, %37 : vector<128x128xf32>
    %39 = vector.shape_cast %38 : vector<128x128xf32> to vector<8x16x128xf32>
    %40 = arith.truncf %39 : vector<8x16x128xf32> to vector<8x16x128xbf16>
    %c0_21 = arith.constant 0 : index
    %c0_22 = arith.constant 0 : index
    %c0_23 = arith.constant 0 : index
    %c0_24 = arith.constant 0 : index
    %41 = vector.load %arg6[%c0_21, %c0_22, %c0_23, %c0_24] : memref<1x8x16x128xbf16, #tpu.memory_space<vmem>>, vector<1x8x16x128xbf16>
    %42 = vector.shape_cast %41 : vector<1x8x16x128xbf16> to vector<8x16x128xbf16>
    %43 = vector.shape_cast %40 : vector<8x16x128xbf16> to vector<1x8x16x128xbf16>
    tpu.vector_store %arg6[%c0_21, %c0_22, %c0_23, %c0_24], %43 {strides = array<i32>} : memref<1x8x16x128xbf16, #tpu.memory_space<vmem>>, vector<1x8x16x128xbf16>,
    return
  }
  func.func @transform_0(%arg0: i32, %arg1: i32, %arg2: i32) -> (i32, i32, i32, i32) {
    %c0_i32 = arith.constant 0 : i32
    %c0_i32_0 = arith.constant 0 : i32
    %c0_i32_1 = arith.constant 0 : i32
    %c0_i32_2 = arith.constant 0 : i32
    return %arg0, %c0_i32, %c0_i32_0, %c0_i32_1 : i32, i32, i32, i32
  }
  func.func @transform_1(%arg0: i32, %arg1: i32, %arg2: i32) -> (i32, i32, i32) {
    %c0_i32 = arith.constant 0 : i32
    %c0_i32_0 = arith.constant 0 : i32
    %c0_i32_1 = arith.constant 0 : i32
    return %c0_i32, %c0_i32_0, %arg1 : i32, i32, i32
  }
  func.func @transform_2(%arg0: i32, %arg1: i32, %arg2: i32) -> (i32, i32) {
    %c0_i32 = arith.constant 0 : i32
    %c0_i32_0 = arith.constant 0 : i32
    return %c0_i32, %arg1 : i32, i32
  }
  func.func @transform_3(%arg0: i32, %arg1: i32, %arg2: i32) -> (i32, i32, i32, i32) {
    %c0_i32 = arith.constant 0 : i32
    %c0_i32_0 = arith.constant 0 : i32
    return %arg0, %arg2, %c0_i32, %arg1 : i32, i32, i32, i32
  }
}

</mosaic_0001>

<llo_original>
// kernel: tpu_custom_call.1
$region0: #{tpu_custom_call.1}
  #allocation0 [shape = 'u32[]', space=smem, size = 0x4, offset = 0x4, fixed_abs, tag = 'smem constant byte address 0x4 - core index']
  #allocation1 [shape = 'u32[144,128]{1,0:T(1,128)}', space=vmem, size = 0x12000, scoped, tag = 'internal scratch']
  %s0 = inlined_call_operand.vmem [shape: bf16[2,18,16,12], index: 0, kind: input, shape index: {}]
  %s1 = inlined_call_operand.vmem [shape: bf16[3,12,128], index: 1, kind: input, shape index: {}]
  %s2 = inlined_call_operand.vmem [shape: f32[1,128], index: 2, kind: input, shape index: {}]
  %s3 = inlined_call_operand.hbm [shape: bf16[2,16,16,128], index: 3, kind: output, shape index: {}]
  %s4 = sld [smem:[#allocation0]]
  $region45: #{tpu_custom_call.1} parent=0
    _
  %s6 = ssub.s32 1, %s4
  %s7 = scalar_select 0, %s6, %s4
  $region1: #{tpu_custom_call.1} parent=0
    #allocation2 [shape = 'u8[65536]{0}', space=vmem, size = 0x10000, scoped, tag = 'output window, operand 0']
    #allocation3 [shape = 's32[2]{0}', space=sflag, size = 0x8, scoped, tag = 'scoped memory for tpu_custom_call.1']
    %8 = vsyncpa [#allocation3], 0
    %s9 = scalar_lea.sflag [#allocation3], 1
    %10 = vsyncpa %s9, 0
    loop: start=0, step=1, limit=6
    $region2: #{tpu_custom_call.1} parent=1 // loop_pre_header
      _
    $region3: #{tpu_custom_call.1} parent=1 // loop_header
      %s12 = sphi 0, %s16
      %p13 = scmp.ge.s32.totalorder %s12, 6
      %s19 = sphi 0, %s38
      %s20 = sphi 0, %s34
      %s21 = sphi 0, %s30
      %s22 = sphi 0, %s19
      %s23 = sphi 0, %s20
      %s24 = sphi 0, %s21
      %s25 = sphi 0, %s22
      %s26 = sphi 0, %s23
      %s27 = sphi 0, %s24
      %s41 = sphi 0, %s43
      %s44 = sphi 0, %s41
      %s45 = sphi 0, %s44
      %s61 = sphi 0, %s45
      %s67 = sphi 0, %s69
      %s70 = sphi 0, %s67
      %s71 = sphi 0, %s70
      %s87 = sphi 0, %s71
      %s93 = sphi 0, %s95
      %s96 = sphi 0, %s93
      %s97 = sphi 0, %s96
      %s113 = sphi 0, %s97
      %s123 = sphi 0, %s125
      %s126 = sphi 0, %s123
      %s127 = sphi 0, %s126
      %s143 = sphi 0, %s127
    $region4: #{tpu_custom_call.1} parent=1 // loop_header_branch
      %15 = sbr.rel (%p13) target = $region8
    $region5: #{tpu_custom_call.1} parent=1 // loop_body
      %s17 = ssub.s32 %s12, 1
      %s18 = ssub.s32 %s12, 2
      %s28 = sadd.s32 1, %s21
      %p29 = scmp.ge.s32.totalorder %s28, 2
      %s30 = scalar_select %p29, 0, %s28
      %s31 = sadd.s32 1, %s20
      %s32 = scalar_select %p29, %s31, %s20
      %p33 = scmp.ge.s32.totalorder %s32, 1
      %s34 = scalar_select %p33, 0, %s32
      %s35 = sadd.s32 1, %s19
      %s36 = scalar_select %p33, %s35, %s19
      %p37 = scmp.ge.s32.totalorder %s36, 2
      %s38 = scalar_select %p37, 0, %s36
      %s39 = ssub.s32 %s19, %s38
      %p40 = scmp.eq.s32.totalorder %s39, 0
      %s42 = sadd.s32 %s41, 1
      %s43 = scalar_select %p40, %s41, %s42
      %p46 = pneg %p40
      %p47 = scmp.eq.s32.totalorder %s12, 3
      %p48 = por %p46, %p47
      %p49 = scmp.ne.s32.totalorder %s41, %s44
      %p50 = scmp.eq.s32.totalorder %s12, 0
      %p51 = por %p49, %p50
      %p52 = scmp.ne.s32.totalorder %s41, %s44
      %p53 = scmp.eq.s32.totalorder %s17, 3
      %p54 = por %p52, %p53
      %p55 = scmp.ne.s32.totalorder %s44, %s45
      %p56 = scmp.eq.s32.totalorder %s17, 0
      %p57 = por %p55, %p56
      %p58 = scmp.ne.s32.totalorder %s44, %s45
      %p59 = scmp.eq.s32.totalorder %s18, 3
      %p60 = por %p58, %p59
      %p62 = scmp.ne.s32.totalorder %s45, %s61
      %p63 = scmp.eq.s32.totalorder %s18, 0
      %p64 = por %p62, %p63
      %s65 = ssub.s32 %s20, %s34
      %p66 = scmp.eq.s32.totalorder %s65, 0
      %s68 = sadd.s32 %s67, 1
      %s69 = scalar_select %p66, %s67, %s68
      %p72 = pneg %p66
      %p73 = scmp.eq.s32.totalorder %s12, 3
      %p74 = por %p72, %p73
      %p75 = scmp.ne.s32.totalorder %s67, %s70
      %p76 = scmp.eq.s32.totalorder %s12, 0
      %p77 = por %p75, %p76
      %p78 = scmp.ne.s32.totalorder %s67, %s70
      %p79 = scmp.eq.s32.totalorder %s17, 3
      %p80 = por %p78, %p79
      %p81 = scmp.ne.s32.totalorder %s70, %s71
      %p82 = scmp.eq.s32.totalorder %s17, 0
      %p83 = por %p81, %p82
      %p84 = scmp.ne.s32.totalorder %s70, %s71
      %p85 = scmp.eq.s32.totalorder %s18, 3
      %p86 = por %p84, %p85
      %p88 = scmp.ne.s32.totalorder %s71, %s87
      %p89 = scmp.eq.s32.totalorder %s18, 0
      %p90 = por %p88, %p89
      %s91 = ssub.s32 %s20, %s34
      %p92 = scmp.eq.s32.totalorder %s91, 0
      %s94 = sadd.s32 %s93, 1
      %s95 = scalar_select %p92, %s93, %s94
      %p98 = pneg %p92
      %p99 = scmp.eq.s32.totalorder %s12, 3
      %p100 = por %p98, %p99
      %p101 = scmp.ne.s32.totalorder %s93, %s96
      %p102 = scmp.eq.s32.totalorder %s12, 0
      %p103 = por %p101, %p102
      %p104 = scmp.ne.s32.totalorder %s93, %s96
      %p105 = scmp.eq.s32.totalorder %s17, 3
      %p106 = por %p104, %p105
      %p107 = scmp.ne.s32.totalorder %s96, %s97
      %p108 = scmp.eq.s32.totalorder %s17, 0
      %p109 = por %p107, %p108
      %p110 = scmp.ne.s32.totalorder %s96, %s97
      %p111 = scmp.eq.s32.totalorder %s18, 3
      %p112 = por %p110, %p111
      %p114 = scmp.ne.s32.totalorder %s97, %s113
      %p115 = scmp.eq.s32.totalorder %s18, 0
      %p116 = por %p114, %p115
      %s117 = ssub.s32 %s19, %s38
      %s118 = ssub.s32 %s21, %s30
      %s119 = sor.u32 %s117, %s118
      %s120 = ssub.s32 %s20, %s34
      %s121 = sor.u32 %s119, %s120
      %p122 = scmp.eq.s32.totalorder %s121, 0
      %s124 = sadd.s32 %s123, 1
      %s125 = scalar_select %p122, %s123, %s124
      %p128 = pneg %p122
      %p129 = scmp.eq.s32.totalorder %s12, 3
      %p130 = por %p128, %p129
      %p131 = scmp.ne.s32.totalorder %s123, %s126
      %p132 = scmp.eq.s32.totalorder %s12, 0
      %p133 = por %p131, %p132
      %p134 = scmp.ne.s32.totalorder %s123, %s126
      %p135 = scmp.eq.s32.totalorder %s17, 3
      %p136 = por %p134, %p135
      %p137 = scmp.ne.s32.totalorder %s126, %s127
      %p138 = scmp.eq.s32.totalorder %s17, 0
      %p139 = por %p137, %p138
      %p140 = scmp.ne.s32.totalorder %s126, %s127
      %p141 = scmp.eq.s32.totalorder %s18, 3
      %p142 = por %p140, %p141
      %p144 = scmp.ne.s32.totalorder %s127, %s143
      %p145 = scmp.eq.s32.totalorder %s18, 0
      %p146 = por %p144, %p145
      %p147 = scmp.le.s32.totalorder 1, %s12
      %p148 = scmp.lt.s32.totalorder %s12, 5
      %p149 = pnand %p147, %p148
      %p150 = pneg %p149
      // Predicated region
      $region9: #{tpu_custom_call.1} parent=5 // pred_check
        _
      $region10: #{tpu_custom_call.1} parent=5 // pred_check_branch
        %152 = sbr.rel (%p149) target = $region12
      $region11: #{tpu_custom_call.1} parent=5 // pred_region
        %s153 = ssub.s32 %s12, 1
        // Predicated region
        $region13: #{tpu_custom_call.1} parent=11 // pred_check
          %p154 = pneg %p83
        $region14: #{tpu_custom_call.1} parent=11 // pred_check_branch
          %156 = sbr.rel (%p154) target = $region16
        $region15: #{tpu_custom_call.1} parent=11 // pred_region
          %p157 = scmp.lt.s32.totalorder %s23, 0
          %s158 = scalar_select %p157, %s23, 0
          %s159 = smul.addr %s158, 4
          %s160 = scalar_lea.vmem %s1, %s159
        $region16: #{tpu_custom_call.1} parent=11 // pred_fallthru
          _
        // Predicated region
        $region17: #{tpu_custom_call.1} parent=11 // pred_check
          %p161 = pneg %p109
        $region18: #{tpu_custom_call.1} parent=11 // pred_check_branch
          %163 = sbr.rel (%p161) target = $region20
        $region19: #{tpu_custom_call.1} parent=11 // pred_region
          %p164 = scmp.lt.s32.totalorder %s23, 0
          %s165 = scalar_select %p164, %s23, 0
          %s166 = scalar_lea.vmem %s2, %s165
        $region20: #{tpu_custom_call.1} parent=11 // pred_fallthru
          _
      $region12: #{tpu_custom_call.1} parent=5 // pred_fallthru
        _
      %p167 = scmp.lt.s32.totalorder %s12, 4
      // Predicated region
      $region21: #{tpu_custom_call.1} parent=5 // pred_check
        %p168 = pneg %p167
      $region22: #{tpu_custom_call.1} parent=5 // pred_check_branch
        %170 = sbr.rel (%p168) target = $region24
      $region23: #{tpu_custom_call.1} parent=5 // pred_region
        // Predicated region
        $region25: #{tpu_custom_call.1} parent=23 // pred_check
          %p171 = pneg %p51
        $region26: #{tpu_custom_call.1} parent=23 // pred_check_branch
          %173 = sbr.rel (%p171) target = $region28
        $region27: #{tpu_custom_call.1} parent=23 // pred_region
          %p174 = scmp.lt.s32.totalorder %s19, 1
          %s175 = scalar_select %p174, %s19, 1
          %s176 = smul.addr %s175, 36
          %s177 = smul.addr %s176, 4
          %s178 = scalar_lea.vmem %s0, %s177
        $region28: #{tpu_custom_call.1} parent=23 // pred_fallthru
          _
      $region24: #{tpu_custom_call.1} parent=5 // pred_fallthru
        _
      %p179 = scmp.le.s32.totalorder 1, %s12
      %p180 = scmp.lt.s32.totalorder %s12, 5
      %p181 = pnand %p179, %p180
      %p182 = pneg %p181
      // Predicated region
      $region29: #{tpu_custom_call.1} parent=5 // pred_check
        _
      $region30: #{tpu_custom_call.1} parent=5 // pred_check_branch
        %184 = sbr.rel (%p181) target = $region32
      $region31: #{tpu_custom_call.1} parent=5 // pred_region
        %s185 = ssub.s32 %s12, 1
        %p186 = scmp.lt.s32.totalorder %s22, 1
        %s187 = scalar_select %p186, %s22, 1
        %s188 = smul.addr %s187, 36
        %s189 = smul.addr %s188, 4
        %s190 = scalar_lea.vmem %s0, %s189
        %p191 = pneg %p57
        %p192 = pneg %p54
        %p193 = scmp.lt.s32.totalorder %s23, 0
        %s194 = scalar_select %p193, %s23, 0
        %s195 = smul.addr %s194, 4
        %s196 = scalar_lea.vmem %s1, %s195
        %p197 = pneg %p83
        %p198 = pneg %p80
        %p199 = scmp.lt.s32.totalorder %s23, 0
        %s200 = scalar_select %p199, %s23, 0
        %s201 = scalar_lea.vmem %s2, %s200
        %p202 = pneg %p109
        %p203 = pneg %p106
        %p204 = pneg %p139
        %p205 = pneg %p136
        %s206 = sand.u32 %s126, 1
        %s207 = scalar_lea.sflag [#allocation3], %s206
        %s208 = sand.u32 %s126, 1
        %s209 = smul.addr %s208, 64
        %s210 = scalar_lea.vmem [#allocation2], %s209
        %p211 = scmp.lt.s32.totalorder %s22, 1
        %s212 = scalar_select %p211, %s22, 1
        %s213 = smul.addr %s212, 36
        %s214 = smul.addr %s213, 4
        %s215 = scalar_lea.vmem %s0, %s214
        %p216 = scmp.lt.s32.totalorder %s23, 0
        %s217 = scalar_select %p216, %s23, 0
        %s218 = smul.addr %s217, 4
        %s219 = scalar_lea.vmem %s1, %s218
        %p220 = scmp.lt.s32.totalorder %s23, 0
        %s221 = scalar_select %p220, %s23, 0
        %s222 = scalar_lea.vmem %s2, %s221
        %s223 = smul.u32 8, %s24
        %s225 = smul.u32 %s24, 8
        %s226 = smul.u32 %s225, 2
        %s227 = smul.addr %s226, 4
        %s228 = scalar_lea.vmem %s215, %s227
        %v229 = vld [vmem:[%s228] sm:$0xf]
        %v230 = vld [vmem:[%s228 + $0x4] sm:$0xf]
        %v231 = vld [vmem:[%s228 + $0x8] sm:$0xf]
        %v232 = vld [vmem:[%s228 + $0xc] sm:$0xf]
        %v233 = vld [vmem:[%s228 + $0x10] sm:$0xf]
        %v234 = vld [vmem:[%s228 + $0x14] sm:$0xf]
        %v235 = vld [vmem:[%s228 + $0x18] sm:$0xf]
        %v236 = vld [vmem:[%s228 + $0x1c] sm:$0xf]
        %v237 = vld [vmem:[%s228 + $0x20] sm:$0xf]
        %v238 = vld [vmem:[%s228 + $0x24] sm:$0xf]
        %v239 = vld [vmem:[%s228 + $0x28] sm:$0xf]
        %v240 = vld [vmem:[%s228 + $0x2c] sm:$0xf]
        %v241 = vld [vmem:[%s228 + $0x30] sm:$0xf]
        %v242 = vld [vmem:[%s228 + $0x34] sm:$0xf]
        %v243 = vld [vmem:[%s228 + $0x38] sm:$0xf]
        %v244 = vld [vmem:[%s228 + $0x3c] sm:$0xf]
        %v245 = vld [vmem:[%s219] sm:$0xf]
        %v246 = vld [vmem:[%s219 + $0x4] sm:$0x3]
        %s247 = sadd.s32 %s225, 1
        %s248 = smul.u32 %s247, 2
        %s249 = smul.addr %s248, 4
        %s250 = scalar_lea.vmem %s215, %s249
        %v251 = vld [vmem:[%s250] sm:$0xf]
        %v252 = vld [vmem:[%s250 + $0x4] sm:$0xf]
        %v253 = vld [vmem:[%s250 + $0x8] sm:$0xf]
        %v254 = vld [vmem:[%s250 + $0xc] sm:$0xf]
        %v255 = vld [vmem:[%s250 + $0x10] sm:$0xf]
        %v256 = vld [vmem:[%s250 + $0x14] sm:$0xf]
        %v257 = vld [vmem:[%s250 + $0x18] sm:$0xf]
        %v258 = vld [vmem:[%s250 + $0x1c] sm:$0xf]
        %v259 = vld [vmem:[%s250 + $0x20] sm:$0xf]
        %v260 = vld [vmem:[%s250 + $0x24] sm:$0xf]
        %v261 = vld [vmem:[%s250 + $0x28] sm:$0xf]
        %v262 = vld [vmem:[%s250 + $0x2c] sm:$0xf]
        %v263 = vld [vmem:[%s250 + $0x30] sm:$0xf]
        %v264 = vld [vmem:[%s250 + $0x34] sm:$0xf]
        %v265 = vld [vmem:[%s250 + $0x38] sm:$0xf]
        %v266 = vld [vmem:[%s250 + $0x3c] sm:$0xf]
        %s267 = scalar_lea.vmem %s219, 8
        %v268 = vld [vmem:[%s267] sm:$0xf]
        %v269 = vld [vmem:[%s267 + $0x4] sm:$0x3]
        %v286 = vunpack.c.l.b16 %v251
        %v287 = vunpack.c.l.b16 %v252
        %v288 = vunpack.c.l.b16 %v253
        %v289 = vunpack.c.l.b16 %v254
        %v290 = vunpack.c.l.b16 %v255
        %v291 = vunpack.c.l.b16 %v256
        %v292 = vunpack.c.l.b16 %v257
        %v293 = vunpack.c.l.b16 %v258
        %v294 = vunpack.c.l.b16 %v259
        %v295 = vunpack.c.l.b16 %v260
        %v296 = vunpack.c.l.b16 %v261
        %v297 = vunpack.c.l.b16 %v262
        %v298 = vunpack.c.l.b16 %v263
        %v299 = vunpack.c.l.b16 %v264
        %v300 = vunpack.c.l.b16 %v265
        %v301 = vunpack.c.l.b16 %v266
        %v302 = vpack.c.b16 %v287, %v286
        %v303 = vpack.c.b16 %v289, %v288
        %v304 = vpack.c.b16 %v291, %v290
        %v305 = vpack.c.b16 %v293, %v292
        %v306 = vpack.c.b16 %v295, %v294
        %v307 = vpack.c.b16 %v297, %v296
        %v308 = vpack.c.b16 %v299, %v298
        %v309 = vpack.c.b16 %v301, %v300
        %v312 = vunpack.c.l.b16 %v268
        %v313 = vunpack.c.l.b16 %v269
        %v314 = vpack.c.b16 %v313, %v312
        %vm315 = vcmask 97280
        %v317 = vsel %vm315, %v302, 0
        %v320 = vsel %vm315, %v303, 0
        %v323 = vsel %vm315, %v304, 0
        %v326 = vsel %vm315, %v305, 0
        %v329 = vsel %vm315, %v306, 0
        %v332 = vsel %vm315, %v307, 0
        %v335 = vsel %vm315, %v308, 0
        %v338 = vsel %vm315, %v309, 0
        %vm340 = vcmask 1045504
        %v342 = vsel %vm340, %v314, 0
        %344 = vmatprep.subr.bf16.mxu0 0
        %345 = vmatpush1.bf16.msra.mxu0 %v342
        %346 = vmatprep.subr.bf16.mxu0 0
        %347 = vmatpush1.bf16.msra.mxu0 0
        %348 = vmatprep.subr.bf16.mxu0 0
        %349 = vmatpush1.bf16.msra.mxu0 0
        %350 = vmatprep.subr.bf16.mxu0 0
        %351 = vmatpush1.bf16.msra.mxu0 0
        %352 = vmatprep.subr.bf16.mxu0 0
        %353 = vmatpush1.bf16.msra.mxu0 0
        %354 = vmatprep.subr.bf16.mxu0 0
        %355 = vmatpush1.bf16.msra.mxu0 0
        %356 = vmatprep.subr.bf16.mxu0 0
        %357 = vmatpush1.bf16.msra.mxu0 0
        %358 = vmatprep.subr.bf16.mxu0 0
        %359 = vmatpush1.bf16.msra.mxu0 0
        %360 = vmatprep.subr.bf16.mxu0 0
        %361 = vmatpush1.bf16.msra.mxu0 0
        %362 = vmatprep.subr.bf16.mxu0 0
        %363 = vmatpush1.bf16.msra.mxu0 0
        %364 = vmatprep.subr.bf16.mxu0 0
        %365 = vmatpush1.bf16.msra.mxu0 0
        %366 = vmatprep.subr.bf16.mxu0 0
        %367 = vmatpush1.bf16.msra.mxu0 0
        %368 = vmatprep.subr.bf16.mxu0 0
        %369 = vmatpush1.bf16.msra.mxu0 0
        %370 = vmatprep.subr.bf16.mxu0 0
        %371 = vmatpush1.bf16.msra.mxu0 0
        %372 = vmatprep.subr.bf16.mxu0 0
        %373 = vmatpush1.bf16.msra.mxu0 0
        %374 = vmatprep.subr.bf16.mxu0 0
        %375 = vmatpush1.bf16.msra.mxu0 0
        %376 = vmatprep.mubr.bf16.mxu0 0
        %377 = vmatmul.mubr.bf16.gmra.mrb[0].mxu0 %v317
        %v378 = vpop.f32.mrb[0].mxu0
        %v379 = vadd.f32 0.0, %v378
        %v380 = vpop.f32.mrb[0].mxu0
        %v381 = vpop.f32.mrb[0].mxu0
        %v382 = vadd.f32 0.0, %v381
        %v383 = vpop.f32.mrb[0].mxu0
        %384 = vmatprep.mubr.bf16.mxu0 0
        %385 = vmatmul.mubr.bf16.gmra.mrb[0].mxu0 %v320
        %v386 = vpop.f32.mrb[0].mxu0
        %v387 = vadd.f32 0.0, %v386
        %v388 = vpop.f32.mrb[0].mxu0
        %v389 = vpop.f32.mrb[0].mxu0
        %v390 = vadd.f32 0.0, %v389
        %v391 = vpop.f32.mrb[0].mxu0
        %392 = vmatprep.mubr.bf16.mxu0 0
        %393 = vmatmul.mubr.bf16.gmra.mrb[0].mxu0 %v323
        %v394 = vpop.f32.mrb[0].mxu0
        %v395 = vadd.f32 0.0, %v394
        %v396 = vpop.f32.mrb[0].mxu0
        %v397 = vpop.f32.mrb[0].mxu0
        %v398 = vadd.f32 0.0, %v397
        %v399 = vpop.f32.mrb[0].mxu0
        %400 = vmatprep.mubr.bf16.mxu0 0
        %401 = vmatmul.mubr.bf16.gmra.mrb[0].mxu0 %v326
        %v402 = vpop.f32.mrb[0].mxu0
        %v403 = vadd.f32 0.0, %v402
        %v404 = vpop.f32.mrb[0].mxu0
        %v405 = vpop.f32.mrb[0].mxu0
        %v406 = vadd.f32 0.0, %v405
        %v407 = vpop.f32.mrb[0].mxu0
        %408 = vmatprep.mubr.bf16.mxu0 0
        %409 = vmatmul.mubr.bf16.gmra.mrb[0].mxu0 %v329
        %v410 = vpop.f32.mrb[0].mxu0
        %v411 = vadd.f32 0.0, %v410
        %v412 = vpop.f32.mrb[0].mxu0
        %v413 = vpop.f32.mrb[0].mxu0
        %v414 = vadd.f32 0.0, %v413
        %v415 = vpop.f32.mrb[0].mxu0
        %416 = vmatprep.mubr.bf16.mxu0 0
        %417 = vmatmul.mubr.bf16.gmra.mrb[0].mxu0 %v332
        %v418 = vpop.f32.mrb[0].mxu0
        %v419 = vadd.f32 0.0, %v418
        %v420 = vpop.f32.mrb[0].mxu0
        %v421 = vpop.f32.mrb[0].mxu0
        %v422 = vadd.f32 0.0, %v421
        %v423 = vpop.f32.mrb[0].mxu0
        %424 = vmatprep.mubr.bf16.mxu0 0
        %425 = vmatmul.mubr.bf16.gmra.mrb[0].mxu0 %v335
        %v426 = vpop.f32.mrb[0].mxu0
        %v427 = vadd.f32 0.0, %v426
        %v428 = vpop.f32.mrb[0].mxu0
        %v429 = vpop.f32.mrb[0].mxu0
        %v430 = vadd.f32 0.0, %v429
        %v431 = vpop.f32.mrb[0].mxu0
        %432 = vmatprep.mubr.bf16.mxu0 0
        %433 = vmatmul.mubr.bf16.gmra.mrb[0].mxu0 %v338
        %v434 = vpop.f32.mrb[0].mxu0
        %v435 = vadd.f32 0.0, %v434
        %v436 = vpop.f32.mrb[0].mxu0
        %v437 = vpop.f32.mrb[0].mxu0
        %v438 = vadd.f32 0.0, %v437
        %v439 = vpop.f32.mrb[0].mxu0
        %440 = vdwg.mxu0
        %v457 = vunpack.c.l.b16 %v229
        %v458 = vunpack.c.l.b16 %v230
        %v459 = vunpack.c.l.b16 %v231
        %v460 = vunpack.c.l.b16 %v232
        %v461 = vunpack.c.l.b16 %v233
        %v462 = vunpack.c.l.b16 %v234
        %v463 = vunpack.c.l.b16 %v235
        %v464 = vunpack.c.l.b16 %v236
        %v465 = vunpack.c.l.b16 %v237
        %v466 = vunpack.c.l.b16 %v238
        %v467 = vunpack.c.l.b16 %v239
        %v468 = vunpack.c.l.b16 %v240
        %v469 = vunpack.c.l.b16 %v241
        %v470 = vunpack.c.l.b16 %v242
        %v471 = vunpack.c.l.b16 %v243
        %v472 = vunpack.c.l.b16 %v244
        %v473 = vpack.c.b16 %v458, %v457
        %v474 = vpack.c.b16 %v460, %v459
        %v475 = vpack.c.b16 %v462, %v461
        %v476 = vpack.c.b16 %v464, %v463
        %v477 = vpack.c.b16 %v466, %v465
        %v478 = vpack.c.b16 %v468, %v467
        %v479 = vpack.c.b16 %v470, %v469
        %v480 = vpack.c.b16 %v472, %v471
        %v483 = vunpack.c.l.b16 %v245
        %v484 = vunpack.c.l.b16 %v246
        %v485 = vpack.c.b16 %v484, %v483
        %v487 = vsel %vm315, %v473, 0
        %v490 = vsel %vm315, %v474, 0
        %v493 = vsel %vm315, %v475, 0
        %v496 = vsel %vm315, %v476, 0
        %v499 = vsel %vm315, %v477, 0
        %v502 = vsel %vm315, %v478, 0
        %v505 = vsel %vm315, %v479, 0
        %v508 = vsel %vm315, %v480, 0
        %v511 = vsel %vm340, %v485, 0
        %513 = vmatprep.subr.bf16.mxu0 0
        %514 = vmatpush1.bf16.msra.mxu0 %v511
        %515 = vmatprep.subr.bf16.mxu0 0
        %516 = vmatpush1.bf16.msra.mxu0 0
        %517 = vmatprep.subr.bf16.mxu0 0
        %518 = vmatpush1.bf16.msra.mxu0 0
        %519 = vmatprep.subr.bf16.mxu0 0
        %520 = vmatpush1.bf16.msra.mxu0 0
        %521 = vmatprep.subr.bf16.mxu0 0
        %522 = vmatpush1.bf16.msra.mxu0 0
        %523 = vmatprep.subr.bf16.mxu0 0
        %524 = vmatpush1.bf16.msra.mxu0 0
        %525 = vmatprep.subr.bf16.mxu0 0
        %526 = vmatpush1.bf16.msra.mxu0 0
        %527 = vmatprep.subr.bf16.mxu0 0
        %528 = vmatpush1.bf16.msra.mxu0 0
        %529 = vmatprep.subr.bf16.mxu0 0
        %530 = vmatpush1.bf16.msra.mxu0 0
        %531 = vmatprep.subr.bf16.mxu0 0
        %532 = vmatpush1.bf16.msra.mxu0 0
        %533 = vmatprep.subr.bf16.mxu0 0
        %534 = vmatpush1.bf16.msra.mxu0 0
        %535 = vmatprep.subr.bf16.mxu0 0
        %536 = vmatpush1.bf16.msra.mxu0 0
        %537 = vmatprep.subr.bf16.mxu0 0
        %538 = vmatpush1.bf16.msra.mxu0 0
        %539 = vmatprep.subr.bf16.mxu0 0
        %540 = vmatpush1.bf16.msra.mxu0 0
        %541 = vmatprep.subr.bf16.mxu0 0
        %542 = vmatpush1.bf16.msra.mxu0 0
        %543 = vmatprep.subr.bf16.mxu0 0
        %544 = vmatpush1.bf16.msra.mxu0 0
        %545 = vmatprep.mubr.bf16.mxu0 0
        %546 = vmatmul.mubr.bf16.gmra.mrb[0].mxu0 %v487
        %v547 = vpop.f32.mrb[0].mxu0
        %v548 = vadd.f32 %v379, %v547
        %v549 = vpop.f32.mrb[0].mxu0
        %v550 = vpop.f32.mrb[0].mxu0
        %v551 = vadd.f32 %v382, %v550
        %v552 = vpop.f32.mrb[0].mxu0
        %553 = vmatprep.mubr.bf16.mxu0 0
        %554 = vmatmul.mubr.bf16.gmra.mrb[0].mxu0 %v490
        %v555 = vpop.f32.mrb[0].mxu0
        %v556 = vadd.f32 %v387, %v555
        %v557 = vpop.f32.mrb[0].mxu0
        %v558 = vpop.f32.mrb[0].mxu0
        %v559 = vadd.f32 %v390, %v558
        %v560 = vpop.f32.mrb[0].mxu0
        %561 = vmatprep.mubr.bf16.mxu0 0
        %562 = vmatmul.mubr.bf16.gmra.mrb[0].mxu0 %v493
        %v563 = vpop.f32.mrb[0].mxu0
        %v564 = vadd.f32 %v395, %v563
        %v565 = vpop.f32.mrb[0].mxu0
        %v566 = vpop.f32.mrb[0].mxu0
        %v567 = vadd.f32 %v398, %v566
        %v568 = vpop.f32.mrb[0].mxu0
        %569 = vmatprep.mubr.bf16.mxu0 0
        %570 = vmatmul.mubr.bf16.gmra.mrb[0].mxu0 %v496
        %v571 = vpop.f32.mrb[0].mxu0
        %v572 = vadd.f32 %v403, %v571
        %v573 = vpop.f32.mrb[0].mxu0
        %v574 = vpop.f32.mrb[0].mxu0
        %v575 = vadd.f32 %v406, %v574
        %v576 = vpop.f32.mrb[0].mxu0
        %577 = vmatprep.mubr.bf16.mxu0 0
        %578 = vmatmul.mubr.bf16.gmra.mrb[0].mxu0 %v499
        %v579 = vpop.f32.mrb[0].mxu0
        %v580 = vadd.f32 %v411, %v579
        %v581 = vpop.f32.mrb[0].mxu0
        %v582 = vpop.f32.mrb[0].mxu0
        %v583 = vadd.f32 %v414, %v582
        %v584 = vpop.f32.mrb[0].mxu0
        %585 = vmatprep.mubr.bf16.mxu0 0
        %586 = vmatmul.mubr.bf16.gmra.mrb[0].mxu0 %v502
        %v587 = vpop.f32.mrb[0].mxu0
        %v588 = vadd.f32 %v419, %v587
        %v589 = vpop.f32.mrb[0].mxu0
        %v590 = vpop.f32.mrb[0].mxu0
        %v591 = vadd.f32 %v422, %v590
        %v592 = vpop.f32.mrb[0].mxu0
        %593 = vmatprep.mubr.bf16.mxu0 0
        %594 = vmatmul.mubr.bf16.gmra.mrb[0].mxu0 %v505
        %v595 = vpop.f32.mrb[0].mxu0
        %v596 = vadd.f32 %v427, %v595
        %v597 = vpop.f32.mrb[0].mxu0
        %v598 = vpop.f32.mrb[0].mxu0
        %v599 = vadd.f32 %v430, %v598
        %v600 = vpop.f32.mrb[0].mxu0
        %601 = vmatprep.mubr.bf16.mxu0 0
        %602 = vmatmul.mubr.bf16.gmra.mrb[0].mxu0 %v508
        %v603 = vpop.f32.mrb[0].mxu0
        %v604 = vadd.f32 %v435, %v603
        %v605 = vpop.f32.mrb[0].mxu0
        %v606 = vpop.f32.mrb[0].mxu0
        %v607 = vadd.f32 %v438, %v606
        %v608 = vpop.f32.mrb[0].mxu0
        %609 = vdwg.mxu0
        %s610 = sadd.s32 %s225, 2
        %s611 = smul.u32 %s610, 2
        %s612 = smul.addr %s611, 4
        %s613 = scalar_lea.vmem %s215, %s612
        %v614 = vld [vmem:[%s613] sm:$0xf]
        %v615 = vld [vmem:[%s613 + $0x4] sm:$0xf]
        %v616 = vld [vmem:[%s613 + $0x8] sm:$0xf]
        %v617 = vld [vmem:[%s613 + $0xc] sm:$0xf]
        %v618 = vld [vmem:[%s613 + $0x10] sm:$0xf]
        %v619 = vld [vmem:[%s613 + $0x14] sm:$0xf]
        %v620 = vld [vmem:[%s613 + $0x18] sm:$0xf]
        %v621 = vld [vmem:[%s613 + $0x1c] sm:$0xf]
        %v622 = vld [vmem:[%s613 + $0x20] sm:$0xf]
        %v623 = vld [vmem:[%s613 + $0x24] sm:$0xf]
        %v624 = vld [vmem:[%s613 + $0x28] sm:$0xf]
        %v625 = vld [vmem:[%s613 + $0x2c] sm:$0xf]
        %v626 = vld [vmem:[%s613 + $0x30] sm:$0xf]
        %v627 = vld [vmem:[%s613 + $0x34] sm:$0xf]
        %v628 = vld [vmem:[%s613 + $0x38] sm:$0xf]
        %v629 = vld [vmem:[%s613 + $0x3c] sm:$0xf]
        %s630 = scalar_lea.vmem %s219, 16
        %v631 = vld [vmem:[%s630] sm:$0xf]
        %v632 = vld [vmem:[%s630 + $0x4] sm:$0x3]
        %v649 = vunpack.c.l.b16 %v614
        %v650 = vunpack.c.l.b16 %v615
        %v651 = vunpack.c.l.b16 %v616
        %v652 = vunpack.c.l.b16 %v617
        %v653 = vunpack.c.l.b16 %v618
        %v654 = vunpack.c.l.b16 %v619
        %v655 = vunpack.c.l.b16 %v620
        %v656 = vunpack.c.l.b16 %v621
        %v657 = vunpack.c.l.b16 %v622
        %v658 = vunpack.c.l.b16 %v623
        %v659 = vunpack.c.l.b16 %v624
        %v660 = vunpack.c.l.b16 %v625
        %v661 = vunpack.c.l.b16 %v626
        %v662 = vunpack.c.l.b16 %v627
        %v663 = vunpack.c.l.b16 %v628
        %v664 = vunpack.c.l.b16 %v629
        %v665 = vpack.c.b16 %v650, %v649
        %v666 = vpack.c.b16 %v652, %v651
        %v667 = vpack.c.b16 %v654, %v653
        %v668 = vpack.c.b16 %v656, %v655
        %v669 = vpack.c.b16 %v658, %v657
        %v670 = vpack.c.b16 %v660, %v659
        %v671 = vpack.c.b16 %v662, %v661
        %v672 = vpack.c.b16 %v664, %v663
        %v675 = vunpack.c.l.b16 %v631
        %v676 = vunpack.c.l.b16 %v632
        %v677 = vpack.c.b16 %v676, %v675
        %v679 = vsel %vm315, %v665, 0
        %v682 = vsel %vm315, %v666, 0
        %v685 = vsel %vm315, %v667, 0
        %v688 = vsel %vm315, %v668, 0
        %v691 = vsel %vm315, %v669, 0
        %v694 = vsel %vm315, %v670, 0
        %v697 = vsel %vm315, %v671, 0
        %v700 = vsel %vm315, %v672, 0
        %v703 = vsel %vm340, %v677, 0
        %705 = vmatprep.subr.bf16.mxu0 0
        %706 = vmatpush1.bf16.msra.mxu0 %v703
        %707 = vmatprep.subr.bf16.mxu0 0
        %708 = vmatpush1.bf16.msra.mxu0 0
        %709 = vmatprep.subr.bf16.mxu0 0
        %710 = vmatpush1.bf16.msra.mxu0 0
        %711 = vmatprep.subr.bf16.mxu0 0
        %712 = vmatpush1.bf16.msra.mxu0 0
        %713 = vmatprep.subr.bf16.mxu0 0
        %714 = vmatpush1.bf16.msra.mxu0 0
        %715 = vmatprep.subr.bf16.mxu0 0
        %716 = vmatpush1.bf16.msra.mxu0 0
        %717 = vmatprep.subr.bf16.mxu0 0
        %718 = vmatpush1.bf16.msra.mxu0 0
        %719 = vmatprep.subr.bf16.mxu0 0
        %720 = vmatpush1.bf16.msra.mxu0 0
        %721 = vmatprep.subr.bf16.mxu0 0
        %722 = vmatpush1.bf16.msra.mxu0 0
        %723 = vmatprep.subr.bf16.mxu0 0
        %724 = vmatpush1.bf16.msra.mxu0 0
        %725 = vmatprep.subr.bf16.mxu0 0
        %726 = vmatpush1.bf16.msra.mxu0 0
        %727 = vmatprep.subr.bf16.mxu0 0
        %728 = vmatpush1.bf16.msra.mxu0 0
        %729 = vmatprep.subr.bf16.mxu0 0
        %730 = vmatpush1.bf16.msra.mxu0 0
        %731 = vmatprep.subr.bf16.mxu0 0
        %732 = vmatpush1.bf16.msra.mxu0 0
        %733 = vmatprep.subr.bf16.mxu0 0
        %734 = vmatpush1.bf16.msra.mxu0 0
        %735 = vmatprep.subr.bf16.mxu0 0
        %736 = vmatpush1.bf16.msra.mxu0 0
        %737 = vmatprep.mubr.bf16.mxu0 0
        %738 = vmatmul.mubr.bf16.gmra.mrb[0].mxu0 %v679
        %v739 = vpop.f32.mrb[0].mxu0
        %v740 = vadd.f32 0.0, %v739
        %v741 = vpop.f32.mrb[0].mxu0
        %v742 = vpop.f32.mrb[0].mxu0
        %v743 = vadd.f32 0.0, %v742
        %v744 = vpop.f32.mrb[0].mxu0
        %745 = vmatprep.mubr.bf16.mxu0 0
        %746 = vmatmul.mubr.bf16.gmra.mrb[0].mxu0 %v682
        %v747 = vpop.f32.mrb[0].mxu0
        %v748 = vadd.f32 0.0, %v747
        %v749 = vpop.f32.mrb[0].mxu0
        %v750 = vpop.f32.mrb[0].mxu0
        %v751 = vadd.f32 0.0, %v750
        %v752 = vpop.f32.mrb[0].mxu0
        %753 = vmatprep.mubr.bf16.mxu0 0
        %754 = vmatmul.mubr.bf16.gmra.mrb[0].mxu0 %v685
        %v755 = vpop.f32.mrb[0].mxu0
        %v756 = vadd.f32 0.0, %v755
        %v757 = vpop.f32.mrb[0].mxu0
        %v758 = vpop.f32.mrb[0].mxu0
        %v759 = vadd.f32 0.0, %v758
        %v760 = vpop.f32.mrb[0].mxu0
        %761 = vmatprep.mubr.bf16.mxu0 0
        %762 = vmatmul.mubr.bf16.gmra.mrb[0].mxu0 %v688
        %v763 = vpop.f32.mrb[0].mxu0
        %v764 = vadd.f32 0.0, %v763
        %v765 = vpop.f32.mrb[0].mxu0
        %v766 = vpop.f32.mrb[0].mxu0
        %v767 = vadd.f32 0.0, %v766
        %v768 = vpop.f32.mrb[0].mxu0
        %769 = vmatprep.mubr.bf16.mxu0 0
        %770 = vmatmul.mubr.bf16.gmra.mrb[0].mxu0 %v691
        %v771 = vpop.f32.mrb[0].mxu0
        %v772 = vadd.f32 0.0, %v771
        %v773 = vpop.f32.mrb[0].mxu0
        %v774 = vpop.f32.mrb[0].mxu0
        %v775 = vadd.f32 0.0, %v774
        %v776 = vpop.f32.mrb[0].mxu0
        %777 = vmatprep.mubr.bf16.mxu0 0
        %778 = vmatmul.mubr.bf16.gmra.mrb[0].mxu0 %v694
        %v779 = vpop.f32.mrb[0].mxu0
        %v780 = vadd.f32 0.0, %v779
        %v781 = vpop.f32.mrb[0].mxu0
        %v782 = vpop.f32.mrb[0].mxu0
        %v783 = vadd.f32 0.0, %v782
        %v784 = vpop.f32.mrb[0].mxu0
        %785 = vmatprep.mubr.bf16.mxu0 0
        %786 = vmatmul.mubr.bf16.gmra.mrb[0].mxu0 %v697
        %v787 = vpop.f32.mrb[0].mxu0
        %v788 = vadd.f32 0.0, %v787
        %v789 = vpop.f32.mrb[0].mxu0
        %v790 = vpop.f32.mrb[0].mxu0
        %v791 = vadd.f32 0.0, %v790
        %v792 = vpop.f32.mrb[0].mxu0
        %793 = vmatprep.mubr.bf16.mxu0 0
        %794 = vmatmul.mubr.bf16.gmra.mrb[0].mxu0 %v700
        %v795 = vpop.f32.mrb[0].mxu0
        %v796 = vadd.f32 0.0, %v795
        %v797 = vpop.f32.mrb[0].mxu0
        %v798 = vpop.f32.mrb[0].mxu0
        %v799 = vadd.f32 0.0, %v798
        %v800 = vpop.f32.mrb[0].mxu0
        %801 = vdwg.mxu0
        %v802 = vadd.f32 %v548, %v740
        %v803 = vadd.f32 %v551, %v743
        %v804 = vadd.f32 %v556, %v748
        %v805 = vadd.f32 %v559, %v751
        %v806 = vadd.f32 %v564, %v756
        %v807 = vadd.f32 %v567, %v759
        %v808 = vadd.f32 %v572, %v764
        %v809 = vadd.f32 %v575, %v767
        %v810 = vadd.f32 %v580, %v772
        %v811 = vadd.f32 %v583, %v775
        %v812 = vadd.f32 %v588, %v780
        %v813 = vadd.f32 %v591, %v783
        %v814 = vadd.f32 %v596, %v788
        %v815 = vadd.f32 %v599, %v791
        %v816 = vadd.f32 %v604, %v796
        %v817 = vadd.f32 %v607, %v799
        %v818 = vld [vmem:[%s222] sm:$0x1]
        %v820 = vlaneseq
        %v821 = vshrl.u32 %v820, 7
        %v822 = vsub.s32 0, %v821
        %v823 = vrot.slane %v818, %v822
        %v825 = vadd.f32 %v802, %v823
        %v826 = vadd.f32 %v803, %v823
        %v827 = vadd.f32 %v804, %v823
        %v828 = vadd.f32 %v805, %v823
        %v829 = vadd.f32 %v806, %v823
        %v830 = vadd.f32 %v807, %v823
        %v831 = vadd.f32 %v808, %v823
        %v832 = vadd.f32 %v809, %v823
        %v833 = vadd.f32 %v810, %v823
        %v834 = vadd.f32 %v811, %v823
        %v835 = vadd.f32 %v812, %v823
        %v836 = vadd.f32 %v813, %v823
        %v837 = vadd.f32 %v814, %v823
        %v838 = vadd.f32 %v815, %v823
        %v839 = vadd.f32 %v816, %v823
        %v840 = vadd.f32 %v817, %v823
        %v841 = vxor.u32 %v825, 2147483648
        %v842 = vxor.u32 %v826, 2147483648
        %v843 = vxor.u32 %v827, 2147483648
        %v844 = vxor.u32 %v828, 2147483648
        %v845 = vxor.u32 %v829, 2147483648
        %v846 = vxor.u32 %v830, 2147483648
        %v847 = vxor.u32 %v831, 2147483648
        %v848 = vxor.u32 %v832, 2147483648
        %v849 = vxor.u32 %v833, 2147483648
        %v850 = vxor.u32 %v834, 2147483648
        %v851 = vxor.u32 %v835, 2147483648
        %v852 = vxor.u32 %v836, 2147483648
        %v853 = vxor.u32 %v837, 2147483648
        %v854 = vxor.u32 %v838, 2147483648
        %v855 = vxor.u32 %v839, 2147483648
        %v856 = vxor.u32 %v840, 2147483648
        %v857 = vmul.f32 %v841, 1.442695
        %v858 = vpow.pop %v857
        %v859 = vmul.f32 %v842, 1.442695
        %v860 = vpow.pop %v859
        %v861 = vmul.f32 %v843, 1.442695
        %v862 = vpow.pop %v861
        %v863 = vmul.f32 %v844, 1.442695
        %v864 = vpow.pop %v863
        %v865 = vmul.f32 %v845, 1.442695
        %v866 = vpow.pop %v865
        %v867 = vmul.f32 %v846, 1.442695
        %v868 = vpow.pop %v867
        %v869 = vmul.f32 %v847, 1.442695
        %v870 = vpow.pop %v869
        %v871 = vmul.f32 %v848, 1.442695
        %v872 = vpow.pop %v871
        %v873 = vmul.f32 %v849, 1.442695
        %v874 = vpow.pop %v873
        %v875 = vmul.f32 %v850, 1.442695
        %v876 = vpow.pop %v875
        %v877 = vmul.f32 %v851, 1.442695
        %v878 = vpow.pop %v877
        %v879 = vmul.f32 %v852, 1.442695
        %v880 = vpow.pop %v879
        %v881 = vmul.f32 %v853, 1.442695
        %v882 = vpow.pop %v881
        %v883 = vmul.f32 %v854, 1.442695
        %v884 = vpow.pop %v883
        %v885 = vmul.f32 %v855, 1.442695
        %v886 = vpow.pop %v885
        %v887 = vmul.f32 %v856, 1.442695
        %v888 = vpow.pop %v887
        %v889 = vadd.f32 %v858, 1.0
        %v890 = vadd.f32 %v860, 1.0
        %v891 = vadd.f32 %v862, 1.0
        %v892 = vadd.f32 %v864, 1.0
        %v893 = vadd.f32 %v866, 1.0
        %v894 = vadd.f32 %v868, 1.0
        %v895 = vadd.f32 %v870, 1.0
        %v896 = vadd.f32 %v872, 1.0
        %v897 = vadd.f32 %v874, 1.0
        %v898 = vadd.f32 %v876, 1.0
        %v899 = vadd.f32 %v878, 1.0
        %v900 = vadd.f32 %v880, 1.0
        %v901 = vadd.f32 %v882, 1.0
        %v902 = vadd.f32 %v884, 1.0
        %v903 = vadd.f32 %v886, 1.0
        %v904 = vadd.f32 %v888, 1.0
        %v905 = vrcp.pop %v889
        %v906 = vmul.f32 1.0, %v905
        %v907 = vrcp.pop %v890
        %v908 = vmul.f32 1.0, %v907
        %v909 = vrcp.pop %v891
        %v910 = vmul.f32 1.0, %v909
        %v911 = vrcp.pop %v892
        %v912 = vmul.f32 1.0, %v911
        %v913 = vrcp.pop %v893
        %v914 = vmul.f32 1.0, %v913
        %v915 = vrcp.pop %v894
        %v916 = vmul.f32 1.0, %v915
        %v917 = vrcp.pop %v895
        %v918 = vmul.f32 1.0, %v917
        %v919 = vrcp.pop %v896
        %v920 = vmul.f32 1.0, %v919
        %v921 = vrcp.pop %v897
        %v922 = vmul.f32 1.0, %v921
        %v923 = vrcp.pop %v898
        %v924 = vmul.f32 1.0, %v923
        %v925 = vrcp.pop %v899
        %v926 = vmul.f32 1.0, %v925
        %v927 = vrcp.pop %v900
        %v928 = vmul.f32 1.0, %v927
        %v929 = vrcp.pop %v901
        %v930 = vmul.f32 1.0, %v929
        %v931 = vrcp.pop %v902
        %v932 = vmul.f32 1.0, %v931
        %v933 = vrcp.pop %v903
        %v934 = vmul.f32 1.0, %v933
        %v935 = vrcp.pop %v904
        %v936 = vmul.f32 1.0, %v935
        %v937 = vmul.f32 %v825, %v906
        %v938 = vmul.f32 %v826, %v908
        %v939 = vmul.f32 %v827, %v910
        %v940 = vmul.f32 %v828, %v912
        %v941 = vmul.f32 %v829, %v914
        %v942 = vmul.f32 %v830, %v916
        %v943 = vmul.f32 %v831, %v918
        %v944 = vmul.f32 %v832, %v920
        %v945 = vmul.f32 %v833, %v922
        %v946 = vmul.f32 %v834, %v924
        %v947 = vmul.f32 %v835, %v926
        %v948 = vmul.f32 %v836, %v928
        %v949 = vmul.f32 %v837, %v930
        %v950 = vmul.f32 %v838, %v932
        %v951 = vmul.f32 %v839, %v934
        %v952 = vmul.f32 %v840, %v936
        %v953 = vpack.c.bf16 %v938, %v937
        %v954 = vpack.c.bf16 %v940, %v939
        %v955 = vpack.c.bf16 %v942, %v941
        %v956 = vpack.c.bf16 %v944, %v943
        %v957 = vpack.c.bf16 %v946, %v945
        %v958 = vpack.c.bf16 %v948, %v947
        %v959 = vpack.c.bf16 %v950, %v949
        %v960 = vpack.c.bf16 %v952, %v951
        %v969 = vunpack.c.l.b16 %v953
        %v970 = vunpack.c.h.b16 %v953
        %v971 = vunpack.c.l.b16 %v954
        %v972 = vunpack.c.h.b16 %v954
        %v973 = vunpack.c.l.b16 %v955
        %v974 = vunpack.c.h.b16 %v955
        %v975 = vunpack.c.l.b16 %v956
        %v976 = vunpack.c.h.b16 %v956
        %v977 = vunpack.c.l.b16 %v957
        %v978 = vunpack.c.h.b16 %v957
        %v979 = vunpack.c.l.b16 %v958
        %v980 = vunpack.c.h.b16 %v958
        %v981 = vunpack.c.l.b16 %v959
        %v982 = vunpack.c.h.b16 %v959
        %v983 = vunpack.c.l.b16 %v960
        %v984 = vunpack.c.h.b16 %v960
        %v985 = vpack.c.b16 %v969, %v969
        %v986 = vpack.c.b16 %v970, %v970
        %v987 = vpack.c.b16 %v971, %v971
        %v988 = vpack.c.b16 %v972, %v972
        %v989 = vpack.c.b16 %v973, %v973
        %v990 = vpack.c.b16 %v974, %v974
        %v991 = vpack.c.b16 %v975, %v975
        %v992 = vpack.c.b16 %v976, %v976
        %v993 = vpack.c.b16 %v977, %v977
        %v994 = vpack.c.b16 %v978, %v978
        %v995 = vpack.c.b16 %v979, %v979
        %v996 = vpack.c.b16 %v980, %v980
        %v997 = vpack.c.b16 %v981, %v981
        %v998 = vpack.c.b16 %v982, %v982
        %v999 = vpack.c.b16 %v983, %v983
        %v1000 = vpack.c.b16 %v984, %v984
        %1017 = vst [vmem:[%s210] sm:$0xf] %v985
        %1018 = vst [vmem:[%s210 + $0x4] sm:$0xf] %v986
        %1019 = vst [vmem:[%s210 + $0x8] sm:$0xf] %v987
        %1020 = vst [vmem:[%s210 + $0xc] sm:$0xf] %v988
        %1021 = vst [vmem:[%s210 + $0x10] sm:$0xf] %v989
        %1022 = vst [vmem:[%s210 + $0x14] sm:$0xf] %v990
        %1023 = vst [vmem:[%s210 + $0x18] sm:$0xf] %v991
        %1024 = vst [vmem:[%s210 + $0x1c] sm:$0xf] %v992
        %1025 = vst [vmem:[%s210 + $0x20] sm:$0xf] %v993
        %1026 = vst [vmem:[%s210 + $0x24] sm:$0xf] %v994
        %1027 = vst [vmem:[%s210 + $0x28] sm:$0xf] %v995
        %1028 = vst [vmem:[%s210 + $0x2c] sm:$0xf] %v996
        %1029 = vst [vmem:[%s210 + $0x30] sm:$0xf] %v997
        %1030 = vst [vmem:[%s210 + $0x34] sm:$0xf] %v998
        %1031 = vst [vmem:[%s210 + $0x38] sm:$0xf] %v999
        %1032 = vst [vmem:[%s210 + $0x3c] sm:$0xf] %v1000
        %s1033 = sand.u32 %s126, 1
        %s1034 = scalar_lea.sflag [#allocation3], %s1033
        %s1035 = sand.u32 %s126, 1
        %s1036 = smul.addr %s1035, 64
        %s1037 = scalar_lea.vmem [#allocation2], %s1036
        // Predicated region
        $region33: #{tpu_custom_call.1} parent=31 // pred_check
          %p1038 = pneg %p136
        $region34: #{tpu_custom_call.1} parent=31 // pred_check_branch
          %1040 = sbr.rel (%p1038) target = $region36
        $region35: #{tpu_custom_call.1} parent=31 // pred_region
          %s1041 = smul.u32 8, %s24
          %s1043 = ssub.s32 1024, 1024
          %1044 = vsyncadd %s1034, %s1043
          %s1045 = smul.addr %s1041, 2
          %s1046 = sadd.s32 %s23, %s1045
          %s1047 = smul.addr %s22, 32
          %s1048 = sadd.s32 %s1046, %s1047
          %s1049 = smul.addr %s1048, 64
          %s1050 = scalar_lea.hbm %s3, %s1049
          %s1051 = sshll.u32 %s1037, 4
          %s1052 = int_to_ptr.vmem [resolvable:$true] %s1051
          %1057 = dma.vmem_to_hbm [thread:$0]  %s1052, 1024, %s1050, %s1034, 64, 64, 4
        $region36: #{tpu_custom_call.1} parent=31 // pred_fallthru
          _
      $region32: #{tpu_custom_call.1} parent=5 // pred_fallthru
        _
      %p1058 = scmp.le.s32.totalorder 2, %s12
      // Predicated region
      $region37: #{tpu_custom_call.1} parent=5 // pred_check
        %p1059 = pneg %p1058
      $region38: #{tpu_custom_call.1} parent=5 // pred_check_branch
        %1061 = sbr.rel (%p1059) target = $region40
      $region39: #{tpu_custom_call.1} parent=5 // pred_region
        %s1062 = ssub.s32 %s12, 2
        // Predicated region
        $region41: #{tpu_custom_call.1} parent=39 // pred_check
          %p1063 = pneg %p142
        $region42: #{tpu_custom_call.1} parent=39 // pred_check_branch
          %1065 = sbr.rel (%p1063) target = $region44
        $region43: #{tpu_custom_call.1} parent=39 // pred_region
          %s1066 = sand.u32 %s127, 1
          %s1067 = scalar_lea.sflag [#allocation3], %s1066
          %s1068 = sand.u32 %s127, 1
          %s1069 = smul.addr %s1068, 64
          %s1070 = scalar_lea.vmem [#allocation2], %s1069
          %1071 = dma.done %s1067, 1024
        $region44: #{tpu_custom_call.1} parent=39 // pred_fallthru
          _
      $region40: #{tpu_custom_call.1} parent=5 // pred_fallthru
        _
    $region6: #{tpu_custom_call.1} parent=1 // loop_footer
      %s16 = sadd.s32 1, %s12
    $region7: #{tpu_custom_call.1} parent=1 // loop_footer_branch
      %11 = sbr.rel target = $region3
    $region8: #{tpu_custom_call.1} parent=1 // loop_exit
      _
    %1072 = vsyncpa [#allocation3], 1
    %s1073 = scalar_lea.sflag [#allocation3], 1
    %1074 = vsyncpa %s1073, 1

</llo_original>
